<compile_context>
chip_gen: v6e
topology: v6e:2x2x1
jax: 0.10.0
libtpu: 0.0.40
codegen_flags: <defaults>
</compile_context>

<pallas_src>
import functools

import jax
import jax.numpy as jnp
from jax.experimental import pallas as pl
from jax.experimental.pallas import tpu as pltpu

KEY_BONE_LEN = 10.0
ROOT_IDX = 0
WRIST_IDX = 0
MCP_IDX = 9
NUM_JOINTS = 21
NUM_POSE = 45
NUM_VERTS = 778
LANES = 128


def _round_up(n, m):
    return ((n + m - 1) // m) * m


def _mano_fit_kernel(const_ref, root_ref, dyn_ref, ref_ref, out_ref, *, batch, out_rows):
    """Joint transform + pinhole projection + 2d / reg / leap3d losses.

    dyn_ref  (VMEM, rows x 128): rows [0,3B) raw hand_joints SoA (row 3b+c, 21 lanes),
                                 rows [3B,4B) pose (45 lanes).
    ref_ref  (VMEM, rows x 128): rows [0,2B) kpts_2d_glob_ref SoA (row 2b+c), row 2B mask,
                                 rows [2B+1,2B+4) leap kpts in joint (x,y,z) order,
                                 row 2B+4 pose_mean, row 2B+5 pose_reg.
    const_ref (SMEM): [inv_scale, K00..K22].   root_ref (SMEM): xyz_root flat (B*3).
    out_ref  (VMEM, rows x 128): rows [0,3B) transformed joints, rows [3B,5B) uv (u,v),
                                 rows [5B,6B) loss_reg, row 6B lanes[0:B]=loss_2d,
                                 lane B = loss_leap3d.
    """
    inv_scale = const_ref[0, 0]
    k00 = const_ref[0, 1]; k01 = const_ref[0, 2]; k02 = const_ref[0, 3]
    k10 = const_ref[0, 4]; k11 = const_ref[0, 5]; k12 = const_ref[0, 6]
    k20 = const_ref[0, 7]; k21 = const_ref[0, 8]; k22 = const_ref[0, 9]
    inv_kbl = 1.0 / KEY_BONE_LEN

    r_uv = 3 * batch
    r_lreg = 5 * batch
    r_loss = 6 * batch
    rr_mask = 2 * batch
    rr_leap = 2 * batch + 1
    rr_pmean = 2 * batch + 4
    rr_preg = 2 * batch + 5

    # Deterministic padding: zero the losses row and trailing pad rows once.
    out_ref[r_loss:out_rows, :] = jnp.zeros((out_rows - r_loss, LANES), jnp.float32)

    lane = jax.lax.broadcasted_iota(jnp.int32, (1, LANES), 1)
    joint_valid = lane < NUM_JOINTS
    mask_row = ref_ref[rr_mask:rr_mask + 1, :]

    jx0 = jy0 = jz0 = None
    for b in range(batch):                       # B is tiny and static -> unrolled
        jb = 3 * b
        # hand_joints / scale + xyz_root (root via SMEM scalar broadcast per row)
        jx = dyn_ref[jb + 0:jb + 1, :] * inv_scale + root_ref[0, 3 * b + 0]
        jy = dyn_ref[jb + 1:jb + 2, :] * inv_scale + root_ref[0, 3 * b + 1]
        jz = dyn_ref[jb + 2:jb + 3, :] * inv_scale + root_ref[0, 3 * b + 2]
        out_ref[jb + 0:jb + 1, :] = jx
        out_ref[jb + 1:jb + 2, :] = jy
        out_ref[jb + 2:jb + 3, :] = jz
        if b == 0:
            jx0, jy0, jz0 = jx, jy, jz

        # projectPoints: unrolled 3x3 against SMEM scalars (not MXU work)
        u = k00 * jx + k01 * jy + k02 * jz
        v = k10 * jx + k11 * jy + k12 * jz
        w = k20 * jx + k21 * jy + k22 * jz
        inv_w = pl.reciprocal(w, approx=False)   # keep exact: matches torch inf/NaN path
        uu = u * inv_w
        vv = v * inv_w
        uu = jnp.where(uu == uu, uu, 0.0)        # NaN (0/0) -> 0, matches torch
        vv = jnp.where(vv == vv, vv, 0.0)
        out_ref[r_uv + 2 * b + 0:r_uv + 2 * b + 1, :] = uu
        out_ref[r_uv + 2 * b + 1:r_uv + 2 * b + 2, :] = vv

        # loss_2d: reference rows are [col0 (vs v), col1 (vs u)]; mask gates selected
        # joints AND the 21..127 padding lanes (where is robust to inf/NaN garbage).
        dv = vv - ref_ref[2 * b + 0:2 * b + 1, :]
        du = uu - ref_ref[2 * b + 1:2 * b + 2, :]
        sq = jnp.where(mask_row > 0.0, dv * dv + du * du, 0.0)
        out_ref[r_loss:r_loss + 1, b:b + 1] = jnp.sum(sq, axis=-1, keepdims=True)

    # loss_reg = (pose - pose_mean)^2 * pose_reg  (all batches at once; pads are 0)
    pose = dyn_ref[3 * batch:4 * batch, :]
    dreg = pose - ref_ref[rr_pmean:rr_pmean + 1, :]
    out_ref[r_lreg:r_lreg + batch, :] = dreg * dreg * ref_ref[rr_preg:rr_preg + 1, :]

    # loss_leap3d = mean((kpts_3d_can_leap - kpts_3d_can[0])^2), computed in joint
    # (x,y,z) order; the mean is invariant to the fixed [1,0,2] glob permutation.
    lx = ref_ref[rr_leap + 0:rr_leap + 1, :]
    ly = ref_ref[rr_leap + 1:rr_leap + 2, :]
    lz = ref_ref[rr_leap + 2:rr_leap + 3, :]
    dlx = (lx - lx[:, ROOT_IDX:ROOT_IDX + 1]) - (jx0 - jx0[:, ROOT_IDX:ROOT_IDX + 1])
    dly = (ly - ly[:, ROOT_IDX:ROOT_IDX + 1]) - (jy0 - jy0[:, ROOT_IDX:ROOT_IDX + 1])
    dlz = (lz - lz[:, ROOT_IDX:ROOT_IDX + 1]) - (jz0 - jz0[:, ROOT_IDX:ROOT_IDX + 1])
    acc = jnp.where(joint_valid, dlx * dlx + dly * dly + dlz * dlz, 0.0)
    leap = jnp.sum(acc, axis=-1, keepdims=True) * (
        inv_kbl * inv_kbl / (NUM_JOINTS * 3.0))
    out_ref[r_loss:r_loss + 1, batch:batch + 1] = leap


def _mano_fit_forward_impl(hand_joints, hand_verts, xyz_root, pose, const_smem, ref_slab):
    B = hand_joints.shape[0]
    dyn_rows = _round_up(4 * B, 8)
    out_rows = _round_up(6 * B + 1, 8)

    # ---- pack the per-call dynamic inputs into one lane-dense VMEM slab ------------
    joints_rows = jnp.transpose(hand_joints, (0, 2, 1)).reshape(3 * B, NUM_JOINTS)
    joints_rows = jnp.pad(joints_rows, ((0, 0), (0, LANES - NUM_JOINTS)))
    pose_rows = jnp.pad(pose, ((0, 0), (0, LANES - NUM_POSE)))
    dyn = jnp.concatenate([joints_rows, pose_rows], axis=0)
    if dyn.shape[0] < dyn_rows:
        dyn = jnp.pad(dyn, ((0, dyn_rows - dyn.shape[0]), (0, 0)))
    root_smem = xyz_root.reshape(1, 3 * B)

    smem = pl.BlockSpec(memory_space=pltpu.MemorySpace.SMEM)
    vmem = pl.BlockSpec(memory_space=pltpu.MemorySpace.VMEM)
    bytes_accessed = 4 * LANES * (dyn.shape[0] + ref_slab.shape[0] + out_rows) + 256

    out = pl.pallas_call(
        functools.partial(_mano_fit_kernel, batch=B, out_rows=out_rows),
        out_shape=jax.ShapeDtypeStruct((out_rows, LANES), jnp.float32),
        in_specs=[smem, smem, vmem, vmem],
        out_specs=vmem,
        cost_estimate=pl.CostEstimate(flops=12000, transcendentals=2 * B * LANES,
                                      bytes_accessed=bytes_accessed),
    )(const_smem, root_smem, dyn, ref_slab)

    # ---- unpack (static slices / tiny permutes only) -------------------------------
    joints_t = jnp.transpose(
        out[0:3 * B, :NUM_JOINTS].reshape(B, 3, NUM_JOINTS), (0, 2, 1))   # (B,21,3)
    kpts_3d_glob = joints_t[:, :, [1, 0, 2]]
    uv_mano_full = jnp.transpose(
        out[3 * B:5 * B, :NUM_JOINTS].reshape(B, 2, NUM_JOINTS), (0, 2, 1))  # (B,21,2)
    kpts_2d_glob = uv_mano_full[:, :, [1, 0]]
    loss_reg = out[5 * B:6 * B, :NUM_POSE]
    loss_2d = out[6 * B, 0:B]
    loss_leap3d = out[6 * B, B]
    kpts_3d_can = (kpts_3d_glob - kpts_3d_glob[0, ROOT_IDX]) / KEY_BONE_LEN

    # verts transform deliberately NOT in the Pallas kernel: one XLA elementwise fusion
    # on the original (B, 778, 3) layout (no transposes, no extra HBM round-trip).
    inv_scale = const_smem[0, 0]
    verts = hand_verts * inv_scale + xyz_root[:, None, :]

    return (kpts_3d_glob, verts, uv_mano_full, kpts_2d_glob, kpts_3d_can,
            loss_2d, loss_reg, loss_leap3d)


mano_fit_forward = jax.jit(_mano_fit_forward_impl)


class Model:
    """JAX/Pallas re-implementation of the MANO fitting model's forward hot path.

    The MANO layer itself (LBS skinning) and the pytorch3d renderer are external
    components; their outputs (hand_verts, hand_joints) are supplied as inputs here.
    """

    def __init__(self, batch_size, hand_verts, hand_joints, root_idx=0):
        # TODO(synk): ManoLayer (LBS), pytorch3d renderer and look_at_rotation have no
        # clean Pallas equivalent; synthetic verts/joints stand in for the MANO output.
        self.batch_size = batch_size
        self.root_idx = root_idx
        self.key_bone_len = KEY_BONE_LEN
        self.K = jnp.array(
            [[374.56138803, 0.0, 196.61636169],
             [0.0, 374.99122761, 209.00920516],
             [0.0, 0.0, 1.0]], dtype=jnp.float32)

        self.xy_root = jnp.zeros((batch_size, 2), jnp.float32)
        self.z_root = jnp.full((batch_size, 1), 50.0, jnp.float32)
        # TODO(synk): utils.clip_mano_hand_{rot,pose,shape} are unavailable; identity clip.
        self.input_rot = jnp.zeros((batch_size, 3), jnp.float32)
        self.input_pose = jnp.zeros((batch_size, NUM_POSE), jnp.float32)
        self.input_shape = jnp.zeros((batch_size, 10), jnp.float32)

        # utils.get_pose_constraint_tensor() surrogate (deterministic)
        self.pose_mean_tensor = jnp.zeros((1, NUM_POSE), jnp.float32)
        self.pose_reg_tensor = jnp.ones((1, NUM_POSE), jnp.float32)

        self.kpts_2d_glob_ref = jnp.zeros((batch_size, NUM_JOINTS, 2), jnp.float32)
        self.kpts_2d_mask = jnp.zeros((NUM_JOINTS, 1), jnp.float32)
        # TODO(synk): utils.leapdata_scaled2ego unavailable; pre-scaled leap keypoints
        # are taken as a direct input.
        self.kpts_3d_glob_leap_scaled = jnp.zeros((NUM_JOINTS, 3), jnp.float32)

        self.hand_verts = hand_verts
        self.hand_joints = hand_joints

        # scale = ||joints[0, mcp] - joints[0, wrist]|| / key_bone_len   (init-time glue)
        bone = hand_joints[0, MCP_IDX] - hand_joints[0, WRIST_IDX]
        self.scale = (jnp.sqrt(jnp.sum(bone ** 2)) / self.key_bone_len).reshape(1, 1)

        # Constant SMEM scalars (1/scale + K), assembled ONCE at init.
        inv_scale = (1.0 / self.scale).reshape(1)
        const = jnp.concatenate([inv_scale, self.K.reshape(-1)]).reshape(1, 10)
        self.const_smem = jnp.pad(const, ((0, 0), (0, 6))).astype(jnp.float32)

        self.refresh_reference_data()

    def refresh_reference_data(self):
        """Re-pack 2d-kpt refs / mask / leap kpts / pose priors into the constant
        (rows, 128) VMEM slab.  Call after mutating those attributes (not per forward)."""
        B = self.batch_size
        ref2d = jnp.transpose(self.kpts_2d_glob_ref, (0, 2, 1)).reshape(2 * B, NUM_JOINTS)
        mask_row = self.kpts_2d_mask.reshape(1, NUM_JOINTS)
        # leap keypoints back to joint (x, y, z) order (mean is invariant to the fixed
        # [1,0,2] glob permutation used by the torch model)
        leap_rows = jnp.transpose(self.kpts_3d_glob_leap_scaled[:, [1, 0, 2]], (1, 0))
        top = jnp.concatenate([ref2d, mask_row, leap_rows], axis=0)           # (2B+4, 21)
        top = jnp.pad(top, ((0, 0), (0, LANES - NUM_JOINTS)))
        pose_consts = jnp.concatenate(
            [self.pose_mean_tensor.reshape(1, NUM_POSE),
             self.pose_reg_tensor.reshape(1, NUM_POSE)], axis=0)              # (2, 45)
        pose_consts = jnp.pad(pose_consts, ((0, 0), (0, LANES - NUM_POSE)))
        slab = jnp.concatenate([top, pose_consts], axis=0)                    # (2B+6, 128)
        rows = _round_up(2 * B + 6, 8)
        if slab.shape[0] < rows:
            slab = jnp.pad(slab, ((0, rows - slab.shape[0]), (0, 0)))
        self.ref_slab = slab.astype(jnp.float32)

    def forward(self):
        xyz_root = jnp.concatenate([self.xy_root, self.z_root], axis=-1)
        pose_adjusted = self.input_pose  # identity clip (see TODO above)
        outs = mano_fit_forward(self.hand_joints, self.hand_verts, xyz_root,
                                pose_adjusted, self.const_smem, self.ref_slab)
        (kpts_3d_glob, verts, uv_mano_full, kpts_2d_glob,
         kpts_3d_can, loss_2d, loss_reg, loss_leap3d) = outs
        self.kpts_3d_glob = kpts_3d_glob
        self.verts = verts
        self.kpts_2d_glob = kpts_2d_glob
        self.kpts_3d_can = kpts_3d_can
        # TODO(synk): loss_seg / image rendering require the external pytorch3d renderer.
        loss_seg = 0.0
        image_render = None
        image_render2 = None
        return (loss_seg, loss_2d, loss_reg, loss_leap3d, image_render, image_render2)


if __name__ == "__main__":
    B = 2
    key = jax.random.PRNGKey(0)
    k1, k2, k3, k4 = jax.random.split(key, 4)

    # Synthetic stand-ins for the MANO layer outputs (deterministic).
    hand_joints = jax.random.normal(k1, (B, NUM_JOINTS, 3), jnp.float32) * 5.0
    hand_verts = jax.random.normal(k2, (B, NUM_VERTS, 3), jnp.float32) * 5.0

    model = Model(batch_size=B, hand_verts=hand_verts, hand_joints=hand_joints)

    # Enable 2d / reg / leap3d loss paths with deterministic reference data.
    model.kpts_2d_glob_ref = jax.random.uniform(k3, (B, NUM_JOINTS, 2), jnp.float32) * 200.0
    sel = [0, 4, 8, 12, 16, 20]  # kpts_2d_idx_set
    model.kpts_2d_mask = model.kpts_2d_mask.at[jnp.array(sel), 0].set(1.0)
    model.kpts_3d_glob_leap_scaled = (
        jax.random.normal(k4, (NUM_JOINTS, 3), jnp.float32) * 2.0 + jnp.array([0.0, 0.0, 50.0]))
    model.input_pose = jax.random.normal(key, (B, NUM_POSE), jnp.float32) * 0.1
    model.refresh_reference_data()  # re-pack the constant slab once after the setters

    loss_seg, loss_2d, loss_reg, loss_leap3d, _, _ = model.forward()
    jax.block_until_ready((loss_2d, loss_reg, loss_leap3d,
                           model.kpts_3d_glob, model.verts,
                           model.kpts_2d_glob, model.kpts_3d_can))
    print("KERNEL_OK")
</pallas_src>

<mosaic_0001>
module attributes {stable_mosaic.version = 11 : i64} {
  func.func @_mano_fit_kernel(%arg0: memref<1x16xf32, #tpu.memory_space<smem>>, %arg1: memref<1x6xf32, #tpu.memory_space<smem>>, %arg2: memref<8x128xf32, #tpu.memory_space<vmem>>, %arg3: memref<16x128xf32, #tpu.memory_space<vmem>>, %arg4: memref<16x128xf32, #tpu.memory_space<vmem>>) attributes {dimension_semantics = [], scalar_prefetch = 0 : i64, scratch_operands = 0 : i64, tpu.core_type = #tpu.core_type<tc>} {
    %c0 = arith.constant 0 : index
    %c0_0 = arith.constant 0 : index
    %0 = memref.load %arg0[%c0, %c0_0] : memref<1x16xf32, #tpu.memory_space<smem>>
    %c0_1 = arith.constant 0 : index
    %c1 = arith.constant 1 : index
    %1 = memref.load %arg0[%c0_1, %c1] : memref<1x16xf32, #tpu.memory_space<smem>>
    %c0_2 = arith.constant 0 : index
    %c2 = arith.constant 2 : index
    %2 = memref.load %arg0[%c0_2, %c2] : memref<1x16xf32, #tpu.memory_space<smem>>
    %c0_3 = arith.constant 0 : index
    %c3 = arith.constant 3 : index
    %3 = memref.load %arg0[%c0_3, %c3] : memref<1x16xf32, #tpu.memory_space<smem>>
    %c0_4 = arith.constant 0 : index
    %c4 = arith.constant 4 : index
    %4 = memref.load %arg0[%c0_4, %c4] : memref<1x16xf32, #tpu.memory_space<smem>>
    %c0_5 = arith.constant 0 : index
    %c5 = arith.constant 5 : index
    %5 = memref.load %arg0[%c0_5, %c5] : memref<1x16xf32, #tpu.memory_space<smem>>
    %c0_6 = arith.constant 0 : index
    %c6 = arith.constant 6 : index
    %6 = memref.load %arg0[%c0_6, %c6] : memref<1x16xf32, #tpu.memory_space<smem>>
    %c0_7 = arith.constant 0 : index
    %c7 = arith.constant 7 : index
    %7 = memref.load %arg0[%c0_7, %c7] : memref<1x16xf32, #tpu.memory_space<smem>>
    %c0_8 = arith.constant 0 : index
    %c8 = arith.constant 8 : index
    %8 = memref.load %arg0[%c0_8, %c8] : memref<1x16xf32, #tpu.memory_space<smem>>
    %c0_9 = arith.constant 0 : index
    %c9 = arith.constant 9 : index
    %9 = memref.load %arg0[%c0_9, %c9] : memref<1x16xf32, #tpu.memory_space<smem>>
    %cst = arith.constant 0.000000e+00 : f32
    %10 = vector.broadcast %cst : f32 to vector<4x128xf32>
    %c12 = arith.constant 12 : index
    %c0_10 = arith.constant 0 : index
    %11 = vector.load %arg4[%c12, %c0_10] : memref<16x128xf32, #tpu.memory_space<vmem>>, vector<4x128xf32>
    tpu.vector_store %arg4[%c12, %c0_10], %10 {strides = array<i32>} : memref<16x128xf32, #tpu.memory_space<vmem>>, vector<4x128xf32>,
    %12 = tpu.iota {dimensions = array<i32: 1>} : vector<1x128xi32>
    %c21_i32 = arith.constant 21 : i32
    %13 = vector.broadcast %c21_i32 : i32 to vector<1x128xi32>
    %14 = arith.cmpi slt, %12, %13 : vector<1x128xi32>
    %c4_11 = arith.constant 4 : index
    %c0_12 = arith.constant 0 : index
    %15 = vector.load %arg3[%c4_11, %c0_12] : memref<16x128xf32, #tpu.memory_space<vmem>>, vector<1x128xf32>
    %c0_13 = arith.constant 0 : index
    %c0_14 = arith.constant 0 : index
    %16 = vector.load %arg2[%c0_13, %c0_14] : memref<8x128xf32, #tpu.memory_space<vmem>>, vector<1x128xf32>
    %17 = vector.broadcast %0 : f32 to vector<1x128xf32>
    %18 = arith.mulf %16, %17 : vector<1x128xf32>
    %c0_15 = arith.constant 0 : index
    %c0_16 = arith.constant 0 : index
    %19 = memref.load %arg1[%c0_15, %c0_16] : memref<1x6xf32, #tpu.memory_space<smem>>
    %20 = vector.broadcast %19 : f32 to vector<1x128xf32>
    %21 = arith.addf %18, %20 : vector<1x128xf32>
    %c1_17 = arith.constant 1 : index
    %c0_18 = arith.constant 0 : index
    %22 = vector.load %arg2[%c1_17, %c0_18] : memref<8x128xf32, #tpu.memory_space<vmem>>, vector<1x128xf32>
    %23 = vector.broadcast %0 : f32 to vector<1x128xf32>
    %24 = arith.mulf %22, %23 : vector<1x128xf32>
    %c0_19 = arith.constant 0 : index
    %c1_20 = arith.constant 1 : index
    %25 = memref.load %arg1[%c0_19, %c1_20] : memref<1x6xf32, #tpu.memory_space<smem>>
    %26 = vector.broadcast %25 : f32 to vector<1x128xf32>
    %27 = arith.addf %24, %26 : vector<1x128xf32>
    %c2_21 = arith.constant 2 : index
    %c0_22 = arith.constant 0 : index
    %28 = vector.load %arg2[%c2_21, %c0_22] : memref<8x128xf32, #tpu.memory_space<vmem>>, vector<1x128xf32>
    %29 = vector.broadcast %0 : f32 to vector<1x128xf32>
    %30 = arith.mulf %28, %29 : vector<1x128xf32>
    %c0_23 = arith.constant 0 : index
    %c2_24 = arith.constant 2 : index
    %31 = memref.load %arg1[%c0_23, %c2_24] : memref<1x6xf32, #tpu.memory_space<smem>>
    %32 = vector.broadcast %31 : f32 to vector<1x128xf32>
    %33 = arith.addf %30, %32 : vector<1x128xf32>
    %c0_25 = arith.constant 0 : index
    %c0_26 = arith.constant 0 : index
    %34 = vector.load %arg4[%c0_25, %c0_26] : memref<16x128xf32, #tpu.memory_space<vmem>>, vector<1x128xf32>
    tpu.vector_store %arg4[%c0_25, %c0_26], %21 {strides = array<i32>} : memref<16x128xf32, #tpu.memory_space<vmem>>, vector<1x128xf32>,
    %c1_27 = arith.constant 1 : index
    %c0_28 = arith.constant 0 : index
    %35 = vector.load %arg4[%c1_27, %c0_28] : memref<16x128xf32, #tpu.memory_space<vmem>>, vector<1x128xf32>
    tpu.vector_store %arg4[%c1_27, %c0_28], %27 {strides = array<i32>} : memref<16x128xf32, #tpu.memory_space<vmem>>, vector<1x128xf32>,
    %c2_29 = arith.constant 2 : index
    %c0_30 = arith.constant 0 : index
    %36 = vector.load %arg4[%c2_29, %c0_30] : memref<16x128xf32, #tpu.memory_space<vmem>>, vector<1x128xf32>
    tpu.vector_store %arg4[%c2_29, %c0_30], %33 {strides = array<i32>} : memref<16x128xf32, #tpu.memory_space<vmem>>, vector<1x128xf32>,
    %37 = vector.broadcast %1 : f32 to vector<1x128xf32>
    %38 = arith.mulf %37, %21 : vector<1x128xf32>
    %39 = vector.broadcast %2 : f32 to vector<1x128xf32>
    %40 = arith.mulf %39, %27 : vector<1x128xf32>
    %41 = arith.addf %38, %40 : vector<1x128xf32>
    %42 = vector.broadcast %3 : f32 to vector<1x128xf32>
    %43 = arith.mulf %42, %33 : vector<1x128xf32>
    %44 = arith.addf %41, %43 : vector<1x128xf32>
    %45 = vector.broadcast %4 : f32 to vector<1x128xf32>
    %46 = arith.mulf %45, %21 : vector<1x128xf32>
    %47 = vector.broadcast %5 : f32 to vector<1x128xf32>
    %48 = arith.mulf %47, %27 : vector<1x128xf32>
    %49 = arith.addf %46, %48 : vector<1x128xf32>
    %50 = vector.broadcast %6 : f32 to vector<1x128xf32>
    %51 = arith.mulf %50, %33 : vector<1x128xf32>
    %52 = arith.addf %49, %51 : vector<1x128xf32>
    %53 = vector.broadcast %7 : f32 to vector<1x128xf32>
    %54 = arith.mulf %53, %21 : vector<1x128xf32>
    %55 = vector.broadcast %8 : f32 to vector<1x128xf32>
    %56 = arith.mulf %55, %27 : vector<1x128xf32>
    %57 = arith.addf %54, %56 : vector<1x128xf32>
    %58 = vector.broadcast %9 : f32 to vector<1x128xf32>
    %59 = arith.mulf %58, %33 : vector<1x128xf32>
    %60 = arith.addf %57, %59 : vector<1x128xf32>
    %61 = tpu.reciprocal %60 : vector<1x128xf32> -> vector<1x128xf32>
    %62 = arith.mulf %44, %61 : vector<1x128xf32>
    %63 = arith.mulf %52, %61 : vector<1x128xf32>
    %64 = arith.cmpf oeq, %62, %62 : vector<1x128xf32>
    %cst_31 = arith.constant 0.000000e+00 : f32
    %65 = vector.broadcast %cst_31 : f32 to vector<1x128xf32>
    %66 = arith.select %64, %62, %65 : vector<1x128xi1>, vector<1x128xf32>
    %67 = arith.cmpf oeq, %63, %63 : vector<1x128xf32>
    %cst_32 = arith.constant 0.000000e+00 : f32
    %68 = vector.broadcast %cst_32 : f32 to vector<1x128xf32>
    %69 = arith.select %67, %63, %68 : vector<1x128xi1>, vector<1x128xf32>
    %c6_33 = arith.constant 6 : index
    %c0_34 = arith.constant 0 : index
    %70 = vector.load %arg4[%c6_33, %c0_34] : memref<16x128xf32, #tpu.memory_space<vmem>>, vector<1x128xf32>
    tpu.vector_store %arg4[%c6_33, %c0_34], %66 {strides = array<i32>} : memref<16x128xf32, #tpu.memory_space<vmem>>, vector<1x128xf32>,
    %c7_35 = arith.constant 7 : index
    %c0_36 = arith.constant 0 : index
    %71 = vector.load %arg4[%c7_35, %c0_36] : memref<16x128xf32, #tpu.memory_space<vmem>>, vector<1x128xf32>
    tpu.vector_store %arg4[%c7_35, %c0_36], %69 {strides = array<i32>} : memref<16x128xf32, #tpu.memory_space<vmem>>, vector<1x128xf32>,
    %c0_37 = arith.constant 0 : index
    %c0_38 = arith.constant 0 : index
    %72 = vector.load %arg3[%c0_37, %c0_38] : memref<16x128xf32, #tpu.memory_space<vmem>>, vector<1x128xf32>
    %73 = arith.subf %69, %72 : vector<1x128xf32>
    %c1_39 = arith.constant 1 : index
    %c0_40 = arith.constant 0 : index
    %74 = vector.load %arg3[%c1_39, %c0_40] : memref<16x128xf32, #tpu.memory_space<vmem>>, vector<1x128xf32>
    %75 = arith.subf %66, %74 : vector<1x128xf32>
    %cst_41 = arith.constant 0.000000e+00 : f32
    %76 = vector.broadcast %cst_41 : f32 to vector<1x128xf32>
    %77 = arith.cmpf ogt, %15, %76 : vector<1x128xf32>
    %78 = arith.mulf %73, %73 : vector<1x128xf32>
    %79 = arith.mulf %75, %75 : vector<1x128xf32>
    %80 = arith.addf %78, %79 : vector<1x128xf32>
    %cst_42 = arith.constant 0.000000e+00 : f32
    %81 = vector.broadcast %cst_42 : f32 to vector<1x128xf32>
    %82 = arith.select %77, %80, %81 : vector<1x128xi1>, vector<1x128xf32>
    %cst_43 = arith.constant dense<0.000000e+00> : vector<1xf32>
    %83 = vector.multi_reduction <add>, %82, %cst_43 [1] : vector<1x128xf32> to vector<1xf32>
    %84 = vector.shape_cast %83 : vector<1xf32> to vector<1x1xf32>
    %c12_44 = arith.constant 12 : index
    %c0_45 = arith.constant 0 : index
    %85 = vector.load %arg4[%c12_44, %c0_45] : memref<16x128xf32, #tpu.memory_space<vmem>>, vector<1x1xf32>
    tpu.vector_store %arg4[%c12_44, %c0_45], %84 {strides = array<i32>} : memref<16x128xf32, #tpu.memory_space<vmem>>, vector<1x1xf32>,
    %c3_46 = arith.constant 3 : index
    %c0_47 = arith.constant 0 : index
    %86 = vector.load %arg2[%c3_46, %c0_47] : memref<8x128xf32, #tpu.memory_space<vmem>>, vector<1x128xf32>
    %87 = vector.broadcast %0 : f32 to vector<1x128xf32>
    %88 = arith.mulf %86, %87 : vector<1x128xf32>
    %c0_48 = arith.constant 0 : index
    %c3_49 = arith.constant 3 : index
    %89 = memref.load %arg1[%c0_48, %c3_49] : memref<1x6xf32, #tpu.memory_space<smem>>
    %90 = vector.broadcast %89 : f32 to vector<1x128xf32>
    %91 = arith.addf %88, %90 : vector<1x128xf32>
    %c4_50 = arith.constant 4 : index
    %c0_51 = arith.constant 0 : index
    %92 = vector.load %arg2[%c4_50, %c0_51] : memref<8x128xf32, #tpu.memory_space<vmem>>, vector<1x128xf32>
    %93 = vector.broadcast %0 : f32 to vector<1x128xf32>
    %94 = arith.mulf %92, %93 : vector<1x128xf32>
    %c0_52 = arith.constant 0 : index
    %c4_53 = arith.constant 4 : index
    %95 = memref.load %arg1[%c0_52, %c4_53] : memref<1x6xf32, #tpu.memory_space<smem>>
    %96 = vector.broadcast %95 : f32 to vector<1x128xf32>
    %97 = arith.addf %94, %96 : vector<1x128xf32>
    %c5_54 = arith.constant 5 : index
    %c0_55 = arith.constant 0 : index
    %98 = vector.load %arg2[%c5_54, %c0_55] : memref<8x128xf32, #tpu.memory_space<vmem>>, vector<1x128xf32>
    %99 = vector.broadcast %0 : f32 to vector<1x128xf32>
    %100 = arith.mulf %98, %99 : vector<1x128xf32>
    %c0_56 = arith.constant 0 : index
    %c5_57 = arith.constant 5 : index
    %101 = memref.load %arg1[%c0_56, %c5_57] : memref<1x6xf32, #tpu.memory_space<smem>>
    %102 = vector.broadcast %101 : f32 to vector<1x128xf32>
    %103 = arith.addf %100, %102 : vector<1x128xf32>
    %c3_58 = arith.constant 3 : index
    %c0_59 = arith.constant 0 : index
    %104 = vector.load %arg4[%c3_58, %c0_59] : memref<16x128xf32, #tpu.memory_space<vmem>>, vector<1x128xf32>
    tpu.vector_store %arg4[%c3_58, %c0_59], %91 {strides = array<i32>} : memref<16x128xf32, #tpu.memory_space<vmem>>, vector<1x128xf32>,
    %c4_60 = arith.constant 4 : index
    %c0_61 = arith.constant 0 : index
    %105 = vector.load %arg4[%c4_60, %c0_61] : memref<16x128xf32, #tpu.memory_space<vmem>>, vector<1x128xf32>
    tpu.vector_store %arg4[%c4_60, %c0_61], %97 {strides = array<i32>} : memref<16x128xf32, #tpu.memory_space<vmem>>, vector<1x128xf32>,
    %c5_62 = arith.constant 5 : index
    %c0_63 = arith.constant 0 : index
    %106 = vector.load %arg4[%c5_62, %c0_63] : memref<16x128xf32, #tpu.memory_space<vmem>>, vector<1x128xf32>
    tpu.vector_store %arg4[%c5_62, %c0_63], %103 {strides = array<i32>} : memref<16x128xf32, #tpu.memory_space<vmem>>, vector<1x128xf32>,
    %107 = vector.broadcast %1 : f32 to vector<1x128xf32>
    %108 = arith.mulf %107, %91 : vector<1x128xf32>
    %109 = vector.broadcast %2 : f32 to vector<1x128xf32>
    %110 = arith.mulf %109, %97 : vector<1x128xf32>
    %111 = arith.addf %108, %110 : vector<1x128xf32>
    %112 = vector.broadcast %3 : f32 to vector<1x128xf32>
    %113 = arith.mulf %112, %103 : vector<1x128xf32>
    %114 = arith.addf %111, %113 : vector<1x128xf32>
    %115 = vector.broadcast %4 : f32 to vector<1x128xf32>
    %116 = arith.mulf %115, %91 : vector<1x128xf32>
    %117 = vector.broadcast %5 : f32 to vector<1x128xf32>
    %118 = arith.mulf %117, %97 : vector<1x128xf32>
    %119 = arith.addf %116, %118 : vector<1x128xf32>
    %120 = vector.broadcast %6 : f32 to vector<1x128xf32>
    %121 = arith.mulf %120, %103 : vector<1x128xf32>
    %122 = arith.addf %119, %121 : vector<1x128xf32>
    %123 = vector.broadcast %7 : f32 to vector<1x128xf32>
    %124 = arith.mulf %123, %91 : vector<1x128xf32>
    %125 = vector.broadcast %8 : f32 to vector<1x128xf32>
    %126 = arith.mulf %125, %97 : vector<1x128xf32>
    %127 = arith.addf %124, %126 : vector<1x128xf32>
    %128 = vector.broadcast %9 : f32 to vector<1x128xf32>
    %129 = arith.mulf %128, %103 : vector<1x128xf32>
    %130 = arith.addf %127, %129 : vector<1x128xf32>
    %131 = tpu.reciprocal %130 : vector<1x128xf32> -> vector<1x128xf32>
    %132 = arith.mulf %114, %131 : vector<1x128xf32>
    %133 = arith.mulf %122, %131 : vector<1x128xf32>
    %134 = arith.cmpf oeq, %132, %132 : vector<1x128xf32>
    %cst_64 = arith.constant 0.000000e+00 : f32
    %135 = vector.broadcast %cst_64 : f32 to vector<1x128xf32>
    %136 = arith.select %134, %132, %135 : vector<1x128xi1>, vector<1x128xf32>
    %137 = arith.cmpf oeq, %133, %133 : vector<1x128xf32>
    %cst_65 = arith.constant 0.000000e+00 : f32
    %138 = vector.broadcast %cst_65 : f32 to vector<1x128xf32>
    %139 = arith.select %137, %133, %138 : vector<1x128xi1>, vector<1x128xf32>
    %c8_66 = arith.constant 8 : index
    %c0_67 = arith.constant 0 : index
    %140 = vector.load %arg4[%c8_66, %c0_67] : memref<16x128xf32, #tpu.memory_space<vmem>>, vector<1x128xf32>
    tpu.vector_store %arg4[%c8_66, %c0_67], %136 {strides = array<i32>} : memref<16x128xf32, #tpu.memory_space<vmem>>, vector<1x128xf32>,
    %c9_68 = arith.constant 9 : index
    %c0_69 = arith.constant 0 : index
    %141 = vector.load %arg4[%c9_68, %c0_69] : memref<16x128xf32, #tpu.memory_space<vmem>>, vector<1x128xf32>
    tpu.vector_store %arg4[%c9_68, %c0_69], %139 {strides = array<i32>} : memref<16x128xf32, #tpu.memory_space<vmem>>, vector<1x128xf32>,
    %c2_70 = arith.constant 2 : index
    %c0_71 = arith.constant 0 : index
    %142 = vector.load %arg3[%c2_70, %c0_71] : memref<16x128xf32, #tpu.memory_space<vmem>>, vector<1x128xf32>
    %143 = arith.subf %139, %142 : vector<1x128xf32>
    %c3_72 = arith.constant 3 : index
    %c0_73 = arith.constant 0 : index
    %144 = vector.load %arg3[%c3_72, %c0_73] : memref<16x128xf32, #tpu.memory_space<vmem>>, vector<1x128xf32>
    %145 = arith.subf %136, %144 : vector<1x128xf32>
    %cst_74 = arith.constant 0.000000e+00 : f32
    %146 = vector.broadcast %cst_74 : f32 to vector<1x128xf32>
    %147 = arith.cmpf ogt, %15, %146 : vector<1x128xf32>
    %148 = arith.mulf %143, %143 : vector<1x128xf32>
    %149 = arith.mulf %145, %145 : vector<1x128xf32>
    %150 = arith.addf %148, %149 : vector<1x128xf32>
    %cst_75 = arith.constant 0.000000e+00 : f32
    %151 = vector.broadcast %cst_75 : f32 to vector<1x128xf32>
    %152 = arith.select %147, %150, %151 : vector<1x128xi1>, vector<1x128xf32>
    %cst_76 = arith.constant dense<0.000000e+00> : vector<1xf32>
    %153 = vector.multi_reduction <add>, %152, %cst_76 [1] : vector<1x128xf32> to vector<1xf32>
    %154 = vector.shape_cast %153 : vector<1xf32> to vector<1x1xf32>
    %c12_77 = arith.constant 12 : index
    %c1_78 = arith.constant 1 : index
    %155 = vector.load %arg4[%c12_77, %c1_78] : memref<16x128xf32, #tpu.memory_space<vmem>>, vector<1x1xf32>
    tpu.vector_store %arg4[%c12_77, %c1_78], %154 {strides = array<i32>} : memref<16x128xf32, #tpu.memory_space<vmem>>, vector<1x1xf32>,
    %c6_79 = arith.constant 6 : index
    %c0_80 = arith.constant 0 : index
    %156 = vector.load %arg2[%c6_79, %c0_80] : memref<8x128xf32, #tpu.memory_space<vmem>>, vector<2x128xf32>
    %c8_81 = arith.constant 8 : index
    %c0_82 = arith.constant 0 : index
    %157 = vector.load %arg3[%c8_81, %c0_82] : memref<16x128xf32, #tpu.memory_space<vmem>>, vector<1x128xf32>
    %158 = vector.broadcast %157 : vector<1x128xf32> to vector<2x128xf32>
    %159 = arith.subf %156, %158 : vector<2x128xf32>
    %160 = arith.mulf %159, %159 : vector<2x128xf32>
    %c9_83 = arith.constant 9 : index
    %c0_84 = arith.constant 0 : index
    %161 = vector.load %arg3[%c9_83, %c0_84] : memref<16x128xf32, #tpu.memory_space<vmem>>, vector<1x128xf32>
    %162 = vector.broadcast %161 : vector<1x128xf32> to vector<2x128xf32>
    %163 = arith.mulf %160, %162 : vector<2x128xf32>
    %c10 = arith.constant 10 : index
    %c0_85 = arith.constant 0 : index
    %164 = vector.load %arg4[%c10, %c0_85] : memref<16x128xf32, #tpu.memory_space<vmem>>, vector<2x128xf32>
    tpu.vector_store %arg4[%c10, %c0_85], %163 {strides = array<i32>} : memref<16x128xf32, #tpu.memory_space<vmem>>, vector<2x128xf32>,
    %c5_86 = arith.constant 5 : index
    %c0_87 = arith.constant 0 : index
    %165 = vector.load %arg3[%c5_86, %c0_87] : memref<16x128xf32, #tpu.memory_space<vmem>>, vector<1x128xf32>
    %c6_88 = arith.constant 6 : index
    %c0_89 = arith.constant 0 : index
    %166 = vector.load %arg3[%c6_88, %c0_89] : memref<16x128xf32, #tpu.memory_space<vmem>>, vector<1x128xf32>
    %c7_90 = arith.constant 7 : index
    %c0_91 = arith.constant 0 : index
    %167 = vector.load %arg3[%c7_90, %c0_91] : memref<16x128xf32, #tpu.memory_space<vmem>>, vector<1x128xf32>
    %168 = vector.extract_strided_slice %165 {offsets = [0, 0], sizes = [1, 1], strides = [1, 1]} : vector<1x128xf32> to vector<1x1xf32>
    %169 = vector.broadcast %168 : vector<1x1xf32> to vector<1x128xf32>
    %170 = arith.subf %165, %169 : vector<1x128xf32>
    %171 = vector.extract_strided_slice %21 {offsets = [0, 0], sizes = [1, 1], strides = [1, 1]} : vector<1x128xf32> to vector<1x1xf32>
    %172 = vector.broadcast %171 : vector<1x1xf32> to vector<1x128xf32>
    %173 = arith.subf %21, %172 : vector<1x128xf32>
    %174 = arith.subf %170, %173 : vector<1x128xf32>
    %175 = vector.extract_strided_slice %166 {offsets = [0, 0], sizes = [1, 1], strides = [1, 1]} : vector<1x128xf32> to vector<1x1xf32>
    %176 = vector.broadcast %175 : vector<1x1xf32> to vector<1x128xf32>
    %177 = arith.subf %166, %176 : vector<1x128xf32>
    %178 = vector.extract_strided_slice %27 {offsets = [0, 0], sizes = [1, 1], strides = [1, 1]} : vector<1x128xf32> to vector<1x1xf32>
    %179 = vector.broadcast %178 : vector<1x1xf32> to vector<1x128xf32>
    %180 = arith.subf %27, %179 : vector<1x128xf32>
    %181 = arith.subf %177, %180 : vector<1x128xf32>
    %182 = vector.extract_strided_slice %167 {offsets = [0, 0], sizes = [1, 1], strides = [1, 1]} : vector<1x128xf32> to vector<1x1xf32>
    %183 = vector.broadcast %182 : vector<1x1xf32> to vector<1x128xf32>
    %184 = arith.subf %167, %183 : vector<1x128xf32>
    %185 = vector.extract_strided_slice %33 {offsets = [0, 0], sizes = [1, 1], strides = [1, 1]} : vector<1x128xf32> to vector<1x1xf32>
    %186 = vector.broadcast %185 : vector<1x1xf32> to vector<1x128xf32>
    %187 = arith.subf %33, %186 : vector<1x128xf32>
    %188 = arith.subf %184, %187 : vector<1x128xf32>
    %189 = arith.mulf %174, %174 : vector<1x128xf32>
    %190 = arith.mulf %181, %181 : vector<1x128xf32>
    %191 = arith.addf %189, %190 : vector<1x128xf32>
    %192 = arith.mulf %188, %188 : vector<1x128xf32>
    %193 = arith.addf %191, %192 : vector<1x128xf32>
    %cst_92 = arith.constant 0.000000e+00 : f32
    %194 = vector.broadcast %cst_92 : f32 to vector<1x128xf32>
    %195 = arith.select %14, %193, %194 : vector<1x128xi1>, vector<1x128xf32>
    %cst_93 = arith.constant dense<0.000000e+00> : vector<1xf32>
    %196 = vector.multi_reduction <add>, %195, %cst_93 [1] : vector<1x128xf32> to vector<1xf32>
    %197 = vector.shape_cast %196 : vector<1xf32> to vector<1x1xf32>
    %cst_94 = arith.constant 1.58730152E-4 : f32
    %198 = vector.broadcast %cst_94 : f32 to vector<1x1xf32>
    %199 = arith.mulf %197, %198 : vector<1x1xf32>
    %c12_95 = arith.constant 12 : index
    %c2_96 = arith.constant 2 : index
    %200 = vector.load %arg4[%c12_95, %c2_96] : memref<16x128xf32, #tpu.memory_space<vmem>>, vector<1x1xf32>
    tpu.vector_store %arg4[%c12_95, %c2_96], %199 {strides = array<i32>} : memref<16x128xf32, #tpu.memory_space<vmem>>, vector<1x1xf32>,
    return
  }
}

</mosaic_0001>

<llo_original>
// kernel: _mano_fit_forward_impl.1
$region0: #{_mano_fit_forward_impl.1}
  #allocation0 [shape = 'u32[]', space=smem, size = 0x4, offset = 0x4, fixed_abs, tag = 'smem constant byte address 0x4 - core index']
  #allocation1 [shape = 'u32[144,128]{1,0:T(1,128)}', space=vmem, size = 0x12000, scoped, tag = 'internal scratch']
  %s0 = inlined_call_operand.vmem [shape: f32[1,16], index: 0, kind: input, shape index: {}]
  %s1 = inlined_call_operand.vmem [shape: f32[1,6], index: 1, kind: input, shape index: {}]
  %s2 = inlined_call_operand.vmem [shape: f32[8,128], index: 2, kind: input, shape index: {}]
  %s3 = inlined_call_operand.vmem [shape: f32[16,128], index: 3, kind: input, shape index: {}]
  %s4 = inlined_call_operand.vmem [shape: f32[16,128], index: 4, kind: output, shape index: {}]
  %s5 = sld [smem:[#allocation0]]
  $region34: #{_mano_fit_forward_impl.1} parent=0
    _
  %s7 = ssub.s32 1, %s5
  %s8 = scalar_select 0, %s7, %s5
  $region1: #{_mano_fit_forward_impl.1} parent=0
    #allocation2 [shape = 'u8[512]{0}', space=smem, size = 0x200, scoped, tag = 'input window, operand 0, single buffered']
    #allocation3 [shape = 's32[1]{0}', space=sflag, size = 0x4, scoped, tag = 'scoped memory for _mano_fit_forward_impl.1']
    #allocation4 [shape = 'u8[512]{0}', space=smem, size = 0x200, scoped, tag = 'input window, operand 1, single buffered']
    #allocation5 [shape = 's32[1]{0}', space=sflag, size = 0x4, scoped, tag = 'scoped memory for _mano_fit_forward_impl.1']
    %9 = vsyncpa [#allocation3], 0
    %10 = vsyncpa [#allocation5], 0
    // Predicated region
    $region2: #{_mano_fit_forward_impl.1} parent=1 // pred_check
      _
    $region3: #{_mano_fit_forward_impl.1} parent=1 // pred_check_branch
      %12 = sbr.rel (0) target = $region5
    $region4: #{_mano_fit_forward_impl.1} parent=1 // pred_region
      %s14 = ssub.s32 16, 16
      %15 = vsyncadd [#allocation3], %s14
      %s17 = sshll.u32 %s0, 4
      %s18 = int_to_ptr.vmem [resolvable:$true] %s17
      %20 = dma.vmem_to_smem %s18, 16, [#allocation2], [#allocation3]
    $region5: #{_mano_fit_forward_impl.1} parent=1 // pred_fallthru
      _
    // Predicated region
    $region6: #{_mano_fit_forward_impl.1} parent=1 // pred_check
      _
    $region7: #{_mano_fit_forward_impl.1} parent=1 // pred_check_branch
      %22 = sbr.rel (0) target = $region9
    $region8: #{_mano_fit_forward_impl.1} parent=1 // pred_region
      %s24 = ssub.s32 16, 16
      %25 = vsyncadd [#allocation5], %s24
      %s27 = sshll.u32 %s1, 4
      %s28 = int_to_ptr.vmem [resolvable:$true] %s27
      %30 = dma.vmem_to_smem %s28, 16, [#allocation4], [#allocation5]
    $region9: #{_mano_fit_forward_impl.1} parent=1 // pred_fallthru
      _
    // Predicated region
    $region10: #{_mano_fit_forward_impl.1} parent=1 // pred_check
      _
    $region11: #{_mano_fit_forward_impl.1} parent=1 // pred_check_branch
      %32 = sbr.rel (0) target = $region13
    $region12: #{_mano_fit_forward_impl.1} parent=1 // pred_region
      _
    $region13: #{_mano_fit_forward_impl.1} parent=1 // pred_fallthru
      _
    // Predicated region
    $region14: #{_mano_fit_forward_impl.1} parent=1 // pred_check
      _
    $region15: #{_mano_fit_forward_impl.1} parent=1 // pred_check_branch
      %34 = sbr.rel (0) target = $region17
    $region16: #{_mano_fit_forward_impl.1} parent=1 // pred_region
      _
    $region17: #{_mano_fit_forward_impl.1} parent=1 // pred_fallthru
      _
    // Predicated region
    $region18: #{_mano_fit_forward_impl.1} parent=1 // pred_check
      _
    $region19: #{_mano_fit_forward_impl.1} parent=1 // pred_check_branch
      %36 = sbr.rel (0) target = $region21
    $region20: #{_mano_fit_forward_impl.1} parent=1 // pred_region
      %37 = dma.done [#allocation3], 16
    $region21: #{_mano_fit_forward_impl.1} parent=1 // pred_fallthru
      _
    // Predicated region
    $region22: #{_mano_fit_forward_impl.1} parent=1 // pred_check
      _
    $region23: #{_mano_fit_forward_impl.1} parent=1 // pred_check_branch
      %39 = sbr.rel (0) target = $region25
    $region24: #{_mano_fit_forward_impl.1} parent=1 // pred_region
      %40 = dma.done [#allocation5], 16
    $region25: #{_mano_fit_forward_impl.1} parent=1 // pred_fallthru
      _
    %41 = sfence
    %s42 = sld [smem:[#allocation2]]
    %s43 = sld [smem:[#allocation2 + $0x1]]
    %s44 = sld [smem:[#allocation2 + $0x2]]
    %s45 = sld [smem:[#allocation2 + $0x3]]
    %s46 = sld [smem:[#allocation2 + $0x4]]
    %s47 = sld [smem:[#allocation2 + $0x5]]
    %s48 = sld [smem:[#allocation2 + $0x6]]
    %s49 = sld [smem:[#allocation2 + $0x7]]
    %s50 = sld [smem:[#allocation2 + $0x8]]
    %s51 = sld [smem:[#allocation2 + $0x9]]
    %52 = vst [vmem:[%s4 + $0xc] sm:$0xf] 0.0
    %v53 = vlaneseq
    %v54 = vand.u32 %v53, 127
    %vm55 = vcmp.lt.s32.totalorder %v54, 21
    %v56 = vld [vmem:[%s3 + $0x4] sm:$0x1]
    %v57 = vld [vmem:[%s2] sm:$0x1]
    %v58 = vstv %s42
    %v59 = vmul.f32 %v57, %v58
    %s60 = sld [smem:[#allocation4]]
    %v61 = vstv %s60
    %v62 = vadd.f32 %v59, %v61
    %v63 = vld [vmem:[%s2 + $0x1] sm:$0x1]
    %v64 = vmul.f32 %v63, %v58
    %s65 = sld [smem:[#allocation4 + $0x1]]
    %v66 = vstv %s65
    %v67 = vadd.f32 %v64, %v66
    %v68 = vld [vmem:[%s2 + $0x2] sm:$0x1]
    %v69 = vmul.f32 %v68, %v58
    %s70 = sld [smem:[#allocation4 + $0x2]]
    %v71 = vstv %s70
    %v72 = vadd.f32 %v69, %v71
    %73 = vst [vmem:[%s4] sm:$0x1] %v62
    %74 = vst [vmem:[%s4 + $0x1] sm:$0x1] %v67
    %75 = vst [vmem:[%s4 + $0x2] sm:$0x1] %v72
    %v76 = vstv %s43
    %v77 = vmul.f32 %v76, %v62
    %v78 = vstv %s44
    %v79 = vmul.f32 %v78, %v67
    %v80 = vadd.f32 %v77, %v79
    %v81 = vstv %s45
    %v82 = vmul.f32 %v81, %v72
    %v83 = vadd.f32 %v80, %v82
    %v84 = vstv %s46
    %v85 = vmul.f32 %v84, %v62
    %v86 = vstv %s47
    %v87 = vmul.f32 %v86, %v67
    %v88 = vadd.f32 %v85, %v87
    %v89 = vstv %s48
    %v90 = vmul.f32 %v89, %v72
    %v91 = vadd.f32 %v88, %v90
    %v92 = vstv %s49
    %v93 = vmul.f32 %v92, %v62
    %v94 = vstv %s50
    %v95 = vmul.f32 %v94, %v67
    %v96 = vadd.f32 %v93, %v95
    %v97 = vstv %s51
    %v98 = vmul.f32 %v97, %v72
    %v99 = vadd.f32 %v96, %v98
    %v100 = vrcp.pop %v99
    %v101 = vmul.f32 %v83, %v100
    %v102 = vmul.f32 %v91, %v100
    %vm103 = vcmp.eq.f32.partialorder %v101, %v101
    %v104 = vsel %vm103, %v101, 0.0
    %vm105 = vcmp.eq.f32.partialorder %v102, %v102
    %v106 = vsel %vm105, %v102, 0.0
    %107 = vst [vmem:[%s4 + $0x6] sm:$0x1] %v104
    %108 = vst [vmem:[%s4 + $0x7] sm:$0x1] %v106
    %v109 = vld [vmem:[%s3] sm:$0x1]
    %v110 = vsub.f32 %v106, %v109
    %v111 = vld [vmem:[%s3 + $0x1] sm:$0x1]
    %v112 = vsub.f32 %v104, %v111
    %vm113 = vcmp.gt.f32.partialorder %v56, 0.0
    %v114 = vmul.f32 %v110, %v110
    %v115 = vmul.f32 %v112, %v112
    %v116 = vadd.f32 %v114, %v115
    %v117 = vsel %vm113, %v116, 0.0
    %vm118 = vcmask 1040384
    %v119 = vsel %vm118, %v117, 0.0
    %120 = vadd.xlane.f32.xlu0 %v119
    %v121 = vpop.xlane.xlu0 %120
    %vm122 = vcmask 0
    %123 = vst.msk [vmem:[%s4 + $0xc] sm:$0x1] %vm122, %v121
    %v124 = vld [vmem:[%s2 + $0x3] sm:$0x1]
    %v125 = vmul.f32 %v124, %v58
    %s126 = sld [smem:[#allocation4 + $0x3]]
    %v127 = vstv %s126
    %v128 = vadd.f32 %v125, %v127
    %v129 = vld [vmem:[%s2 + $0x4] sm:$0x1]
    %v130 = vmul.f32 %v129, %v58
    %s131 = sld [smem:[#allocation4 + $0x4]]
    %v132 = vstv %s131
    %v133 = vadd.f32 %v130, %v132
    %v134 = vld [vmem:[%s2 + $0x5] sm:$0x1]
    %v135 = vmul.f32 %v134, %v58
    %s136 = sld [smem:[#allocation4 + $0x5]]
    %v137 = vstv %s136
    %v138 = vadd.f32 %v135, %v137
    %139 = vst [vmem:[%s4 + $0x3] sm:$0x1] %v128
    %140 = vst [vmem:[%s4 + $0x4] sm:$0x1] %v133
    %141 = vst [vmem:[%s4 + $0x5] sm:$0x1] %v138
    %v142 = vmul.f32 %v76, %v128
    %v143 = vmul.f32 %v78, %v133
    %v144 = vadd.f32 %v142, %v143
    %v145 = vmul.f32 %v81, %v138
    %v146 = vadd.f32 %v144, %v145
    %v147 = vmul.f32 %v84, %v128
    %v148 = vmul.f32 %v86, %v133
    %v149 = vadd.f32 %v147, %v148
    %v150 = vmul.f32 %v89, %v138
    %v151 = vadd.f32 %v149, %v150
    %v152 = vmul.f32 %v92, %v128
    %v153 = vmul.f32 %v94, %v133
    %v154 = vadd.f32 %v152, %v153
    %v155 = vmul.f32 %v97, %v138
    %v156 = vadd.f32 %v154, %v155
    %v157 = vrcp.pop %v156
    %v158 = vmul.f32 %v146, %v157
    %v159 = vmul.f32 %v151, %v157
    %vm160 = vcmp.eq.f32.partialorder %v158, %v158
    %v161 = vsel %vm160, %v158, 0.0
    %vm162 = vcmp.eq.f32.partialorder %v159, %v159
    %v163 = vsel %vm162, %v159, 0.0
    %164 = vst [vmem:[%s4 + $0x8] sm:$0x1] %v161
    %165 = vst [vmem:[%s4 + $0x9] sm:$0x1] %v163
    %v166 = vld [vmem:[%s3 + $0x2] sm:$0x1]
    %v167 = vsub.f32 %v163, %v166
    %v168 = vld [vmem:[%s3 + $0x3] sm:$0x1]
    %v169 = vsub.f32 %v161, %v168
    %v170 = vmul.f32 %v167, %v167
    %v171 = vmul.f32 %v169, %v169
    %v172 = vadd.f32 %v170, %v171
    %v173 = vsel %vm113, %v172, 0.0
    %v174 = vsel %vm118, %v173, 0.0
    %175 = vadd.xlane.f32.xlu0 %v174
    %v176 = vpop.xlane.xlu0 %175
    %vm177 = vcmask 8200
    %178 = vst.msk [vmem:[%s4 + $0xc] sm:$0x1] %vm177, %v176
    %v179 = vld [vmem:[%s2 + $0x6] sm:$0x3]
    %v180 = vld [vmem:[%s3 + $0x8] sm:$0x1]
    %v181 = vlaneseq
    %v182 = vshrl.u32 %v181, 7
    %v183 = vsub.s32 0, %v182
    %v184 = vrot.slane %v180, %v183
    %v185 = vsub.f32 %v179, %v184
    %v186 = vmul.f32 %v185, %v185
    %v187 = vld [vmem:[%s3 + $0x9] sm:$0x1]
    %v188 = vlaneseq
    %v189 = vshrl.u32 %v188, 7
    %v190 = vsub.s32 0, %v189
    %v191 = vrot.slane %v187, %v190
    %v192 = vmul.f32 %v186, %v191
    %193 = vst [vmem:[%s4 + $0xa] sm:$0x3] %v192
    %v194 = vld [vmem:[%s3 + $0x5] sm:$0x1]
    %v195 = vld [vmem:[%s3 + $0x6] sm:$0x1]
    %v196 = vld [vmem:[%s3 + $0x7] sm:$0x1]
    %198 = vset.pattern.permute.xlu0 0
    %199 = vperm.xlu0 %198, %v194
    %v200 = vpop.permute.xlu0 %199
    %v202 = vsub.f32 %v194, %v200
    %204 = vset.pattern.permute.xlu0 0
    %205 = vperm.xlu0 %204, %v62
    %v206 = vpop.permute.xlu0 %205
    %v208 = vsub.f32 %v62, %v206
    %v209 = vsub.f32 %v202, %v208
    %211 = vset.pattern.permute.xlu0 0
    %212 = vperm.xlu0 %211, %v195
    %v213 = vpop.permute.xlu0 %212
    %v215 = vsub.f32 %v195, %v213
    %217 = vset.pattern.permute.xlu0 0
    %218 = vperm.xlu0 %217, %v67
    %v219 = vpop.permute.xlu0 %218
    %v221 = vsub.f32 %v67, %v219
    %v222 = vsub.f32 %v215, %v221
    %224 = vset.pattern.permute.xlu0 0
    %225 = vperm.xlu0 %224, %v196
    %v226 = vpop.permute.xlu0 %225
    %v228 = vsub.f32 %v196, %v226
    %230 = vset.pattern.permute.xlu0 0
    %231 = vperm.xlu0 %230, %v72
    %v232 = vpop.permute.xlu0 %231
    %v234 = vsub.f32 %v72, %v232
    %v235 = vsub.f32 %v228, %v234
    %v236 = vmul.f32 %v209, %v209
    %v237 = vmul.f32 %v222, %v222
    %v238 = vadd.f32 %v236, %v237
    %v239 = vmul.f32 %v235, %v235
    %v240 = vadd.f32 %v238, %v239
    %v241 = vsel %vm55, %v240, 0.0
    %v242 = vsel %vm118, %v241, 0.0
    %243 = vadd.xlane.f32.xlu0 %v242
    %v244 = vpop.xlane.xlu0 %243
    %v245 = vmul.f32 %v244, 0.00015873015
    %vm246 = vcmask 16400
    %247 = vst.msk [vmem:[%s4 + $0xc] sm:$0x1] %vm246, %v245
    // Predicated region
    $region26: #{_mano_fit_forward_impl.1} parent=1 // pred_check
      _
    $region27: #{_mano_fit_forward_impl.1} parent=1 // pred_check_branch
      %249 = sbr.rel (0) target = $region29
    $region28: #{_mano_fit_forward_impl.1} parent=1 // pred_region
      _
    $region29: #{_mano_fit_forward_impl.1} parent=1 // pred_fallthru
      _
    // Predicated region
    $region30: #{_mano_fit_forward_impl.1} parent=1 // pred_check
      _
    $region31: #{_mano_fit_forward_impl.1} parent=1 // pred_check_branch
      %251 = sbr.rel (0) target = $region33
    $region32: #{_mano_fit_forward_impl.1} parent=1 // pred_region
      _
    $region33: #{_mano_fit_forward_impl.1} parent=1 // pred_fallthru
      _
    %252 = vsyncpa [#allocation3], 1
    %253 = vsyncpa [#allocation5], 1

</llo_original>
